<compile_context>
chip_gen: v7x
topology: tpu7x:2x2x1
jax: 0.10.0
libtpu: 0.0.40
codegen_flags: <defaults>
</compile_context>

<pallas_src>
import jax
import jax.numpy as jnp
from jax.experimental import pallas as pl
from jax.experimental.pallas import tpu as pltpu


def _leaky_relu(x, slope=0.2):
    return jnp.where(x > 0, x, slope * x)


def _round_up(n, m):
    return ((n + m - 1) // m) * m


def _cdiv(a, b):
    return -(-a // b)


def _num_tensorcores():
    """Best-effort: does one Pallas grid span >1 TensorCore on this part?"""
    try:
        kind = jax.devices()[0].device_kind.lower()
    except Exception:
        return 1
    # v7x has 2 TCs/chip; v3/v4/v5p megacores also split "parallel" grid axes.
    if any(tag in kind for tag in ("7", "v3", "v4", "v5p")):
        return 2
    return 1


def _vmem_limit_bytes(tb, F, H1, H2):
    # Double-buffered f32 x tile + resident weights/biases + output tiles,
    # plus headroom for the f32 h1/h2 intermediates and bf16 copies.
    bufs = 2 * tb * F * 4
    bufs += 2 * ((F * H1 + H1 * H2 + H2) * 2 + (H1 + H2 + 1) * 4)
    bufs += 2 * tb * 128 * 4                      # (tb, 1) tiles pad to 128 lanes
    interm = 2 * tb * (H1 + H2 + 1) * 4
    est = int((bufs + interm) * 1.5)
    # Floor above v5e's 16 MiB default scoped limit, cap below v7x's 64 MiB VMEM.
    return min(56 << 20, max(32 << 20, est))


def discriminator_kernel(x_ref, w1_ref, b1_ref, w2_ref, b2_ref, w3_ref, b3_ref, o_ref):
    # x_ref: (tb, F) float32 batch tile; cast to bf16 in-kernel (cheap VPU op,
    # the MXU wants bf16 anyway) so the wrapper does not burn an extra HBM pass.
    x = x_ref[...].astype(jnp.bfloat16)

    # Layer 1: (tb, F) @ (F, 512) on the MXU, f32 accumulation; bias + LeakyReLU in f32.
    h1 = jnp.dot(x, w1_ref[...], preferred_element_type=jnp.float32) + b1_ref[...]
    h1 = _leaky_relu(h1)

    # Layer 2: (tb, 512) @ (512, 256).
    h2 = jnp.dot(h1.astype(jnp.bfloat16), w2_ref[...],
                 preferred_element_type=jnp.float32) + b2_ref[...]
    h2 = _leaky_relu(h2)

    # Layer 3 (256 -> 1): natural-layout matmul -> (tb, 1); no h2 transpose.
    logits = jnp.dot(h2.astype(jnp.bfloat16), w3_ref[...],
                     preferred_element_type=jnp.float32) + b3_ref[0, 0]

    o_ref[...] = jax.nn.sigmoid(logits).astype(o_ref.dtype)


def discriminator_forward(x, params, *, tb=1024):
    """x: (B, F) float32; params: dict of w1,b1,w2,b2,w3,b3. Returns (B, 1) f32."""
    B, F = x.shape
    w1, b1 = params["w1"], params["b1"]   # (F, 512), (1, 512)
    w2, b2 = params["w2"], params["b2"]   # (512, 256), (1, 256)
    w3, b3 = params["w3"], params["b3"]   # (256, 1), (1, 1)
    H1, H2 = w1.shape[1], w2.shape[1]

    # ---- batch tiling ------------------------------------------------------
    if B <= 128:
        # Small-batch / low-latency path: one tile, rows rounded to the 8-row
        # f32 sublane instead of padding all the way to 128.
        tb_eff = _round_up(max(B, 8), 8)
        nt = 1
    else:
        tb_max = max(128, (int(tb) // 128) * 128)   # fat tiles (default 1024)
        B128 = _round_up(B, 128)
        nt = _cdiv(B128, tb_max)
        if _num_tensorcores() >= 2:
            # Keep an even number of steps so both TensorCores stay balanced.
            if nt == 1 and B128 >= 256:
                nt = 2
            elif nt > 1 and nt % 2 == 1:
                nt += 1
        tb_eff = _round_up(_cdiv(B128, nt), 128)
    B_pad = nt * tb_eff

    if B_pad != B:
        # Only a small tail copy; tiles are chosen to keep this minimal.
        x = jnp.pad(x, ((0, B_pad - B), (0, 0)))

    # ---- dtype prep: bf16 weights on the MXU path, f32 biases --------------
    # (x is left as f32 and cast in-kernel; weights are tiny & VMEM-resident.)
    w1_bf = w1.astype(jnp.bfloat16)
    w2_bf = w2.astype(jnp.bfloat16)
    w3_bf = w3.reshape(H2, 1).astype(jnp.bfloat16)
    b1_f = b1.reshape(1, H1).astype(jnp.float32)
    b2_f = b2.reshape(1, H2).astype(jnp.float32)
    b3_f = b3.reshape(1, 1).astype(jnp.float32)      # SMEM scalar

    full = lambda i: (0, 0)   # weights/biases resident for every batch tile

    out = pl.pallas_call(
        discriminator_kernel,
        out_shape=jax.ShapeDtypeStruct((B_pad, 1), jnp.float32),
        grid_spec=pltpu.PrefetchScalarGridSpec(
            num_scalar_prefetch=0,
            grid=(nt,),
            in_specs=[
                pl.BlockSpec((tb_eff, F), lambda i: (i, 0)),        # x tile (f32)
                pl.BlockSpec((F, H1), full),                        # w1 (bf16)
                pl.BlockSpec((1, H1), full),                        # b1 (f32)
                pl.BlockSpec((H1, H2), full),                       # w2 (bf16)
                pl.BlockSpec((1, H2), full),                        # b2 (f32)
                pl.BlockSpec((H2, 1), full),                        # w3 (bf16)
                pl.BlockSpec(memory_space=pltpu.MemorySpace.SMEM),  # b3 scalar
            ],
            out_specs=pl.BlockSpec((tb_eff, 1), lambda i: (i, 0)),
        ),
        compiler_params=pltpu.CompilerParams(
            dimension_semantics=("parallel",),
            vmem_limit_bytes=_vmem_limit_bytes(tb_eff, F, H1, H2),
        ),
    )(x, w1_bf, b1_f, w2_bf, b2_f, w3_bf, b3_f)

    return out[:B]


def init_params(key, in_features):
    """Deterministic synthetic init (shapes match the nn.Linear layers)."""
    k1, k2, k3, k4, k5, k6 = jax.random.split(key, 6)

    def lin(kw, kb, fan_in, fan_out):
        bound = 1.0 / jnp.sqrt(fan_in)
        w = jax.random.uniform(kw, (fan_in, fan_out), jnp.float32, -bound, bound)
        b = jax.random.uniform(kb, (1, fan_out), jnp.float32, -bound, bound)
        return w, b

    w1, b1 = lin(k1, k2, in_features, 512)
    w2, b2 = lin(k3, k4, 512, 256)
    w3, b3 = lin(k5, k6, 256, 1)
    return {"w1": w1, "b1": b1, "w2": w2, "b2": b2, "w3": w3, "b3": b3}


def reference_forward(x, p):
    h1 = _leaky_relu(x @ p["w1"] + p["b1"])
    h2 = _leaky_relu(h1 @ p["w2"] + p["b2"])
    return jax.nn.sigmoid(h2 @ p["w3"] + p["b3"])


if __name__ == "__main__":
    key = jax.random.PRNGKey(0)
    kx, kp = jax.random.split(key)

    B, F = 8, 32   # small batch, small feature dim (out_shape)
    x = jax.random.normal(kx, (B, F), dtype=jnp.float32)
    params = init_params(kp, F)

    out = jax.block_until_ready(discriminator_forward(x, params))

    ref = reference_forward(x, params)
    assert out.shape == (B, 1)
    # bf16 MXU inputs vs the f32 reference -> loose-but-tight-enough tolerance.
    assert jnp.allclose(out, ref, atol=2e-2), "mismatch vs reference"

    print("KERNEL_OK")
</pallas_src>

<mosaic_0001>
module attributes {stable_mosaic.version = 11 : i64} {
  func.func @discriminator_kernel(%arg0: i32, %arg1: memref<8x32xf32, #tpu.memory_space<vmem>>, %arg2: memref<32x512xbf16, #tpu.memory_space<vmem>>, %arg3: memref<1x512xf32, #tpu.memory_space<vmem>>, %arg4: memref<512x256xbf16, #tpu.memory_space<vmem>>, %arg5: memref<1x256xf32, #tpu.memory_space<vmem>>, %arg6: memref<256x1xbf16, #tpu.memory_space<vmem>>, %arg7: memref<1x1xf32, #tpu.memory_space<smem>>, %arg8: memref<8x1xf32, #tpu.memory_space<vmem>>) attributes {dimension_semantics = [#tpu.dimension_semantics<parallel>], iteration_bounds = array<i64: 1>, scalar_prefetch = 0 : i64, scratch_operands = 0 : i64, tpu.core_type = #tpu.core_type<tc>, window_params = [{transform_indices = @transform_0, window_bounds = array<i64: 8, 32>}, {pipeline_mode = #tpu.pipeline_mode<synchronous>, transform_indices = @transform_1, window_bounds = array<i64: 32, 512>}, {pipeline_mode = #tpu.pipeline_mode<synchronous>, transform_indices = @transform_2, window_bounds = array<i64: 1, 512>}, {pipeline_mode = #tpu.pipeline_mode<synchronous>, transform_indices = @transform_3, window_bounds = array<i64: 512, 256>}, {pipeline_mode = #tpu.pipeline_mode<synchronous>, transform_indices = @transform_4, window_bounds = array<i64: 1, 256>}, {pipeline_mode = #tpu.pipeline_mode<synchronous>, transform_indices = @transform_5, window_bounds = array<i64: 256, 1>}, {transform_indices = @transform_6, window_bounds = array<i64: 1, 1>}, {transform_indices = @transform_7, window_bounds = array<i64: 8, 1>}]} {
    %c0 = arith.constant 0 : index
    %c0_0 = arith.constant 0 : index
    %0 = vector.load %arg1[%c0, %c0_0] : memref<8x32xf32, #tpu.memory_space<vmem>>, vector<8x32xf32>
    %1 = arith.truncf %0 : vector<8x32xf32> to vector<8x32xbf16>
    %c0_1 = arith.constant 0 : index
    %c0_2 = arith.constant 0 : index
    %2 = vector.load %arg2[%c0_1, %c0_2] : memref<32x512xbf16, #tpu.memory_space<vmem>>, vector<32x512xbf16>
    %cst = arith.constant dense<0.000000e+00> : vector<8x512xf32>
    %3 = tpu.matmul %1, %2, %cst {dimension_numbers = #tpu.dot_dimension_numbers<[1], [0], [0], [1], [0, 0, 1, 1], [], []>} : vector<8x32xbf16>, vector<32x512xbf16>, vector<8x512xf32> -> vector<8x512xf32>
    %c0_3 = arith.constant 0 : index
    %c0_4 = arith.constant 0 : index
    %4 = vector.load %arg3[%c0_3, %c0_4] : memref<1x512xf32, #tpu.memory_space<vmem>>, vector<1x512xf32>
    %5 = vector.broadcast %4 : vector<1x512xf32> to vector<8x512xf32>
    %6 = arith.addf %3, %5 : vector<8x512xf32>
    %cst_5 = arith.constant 0.000000e+00 : f32
    %7 = vector.broadcast %cst_5 : f32 to vector<8x512xf32>
    %8 = arith.cmpf ogt, %6, %7 : vector<8x512xf32>
    %cst_6 = arith.constant 2.000000e-01 : f32
    %9 = vector.broadcast %cst_6 : f32 to vector<8x512xf32>
    %10 = arith.mulf %9, %6 : vector<8x512xf32>
    %11 = arith.select %8, %6, %10 : vector<8x512xi1>, vector<8x512xf32>
    %12 = arith.truncf %11 : vector<8x512xf32> to vector<8x512xbf16>
    %c0_7 = arith.constant 0 : index
    %c0_8 = arith.constant 0 : index
    %13 = vector.load %arg4[%c0_7, %c0_8] : memref<512x256xbf16, #tpu.memory_space<vmem>>, vector<512x256xbf16>
    %cst_9 = arith.constant dense<0.000000e+00> : vector<8x256xf32>
    %14 = tpu.matmul %12, %13, %cst_9 {dimension_numbers = #tpu.dot_dimension_numbers<[1], [0], [0], [1], [0, 0, 1, 1], [], []>} : vector<8x512xbf16>, vector<512x256xbf16>, vector<8x256xf32> -> vector<8x256xf32>
    %c0_10 = arith.constant 0 : index
    %c0_11 = arith.constant 0 : index
    %15 = vector.load %arg5[%c0_10, %c0_11] : memref<1x256xf32, #tpu.memory_space<vmem>>, vector<1x256xf32>
    %16 = vector.broadcast %15 : vector<1x256xf32> to vector<8x256xf32>
    %17 = arith.addf %14, %16 : vector<8x256xf32>
    %cst_12 = arith.constant 0.000000e+00 : f32
    %18 = vector.broadcast %cst_12 : f32 to vector<8x256xf32>
    %19 = arith.cmpf ogt, %17, %18 : vector<8x256xf32>
    %cst_13 = arith.constant 2.000000e-01 : f32
    %20 = vector.broadcast %cst_13 : f32 to vector<8x256xf32>
    %21 = arith.mulf %20, %17 : vector<8x256xf32>
    %22 = arith.select %19, %17, %21 : vector<8x256xi1>, vector<8x256xf32>
    %23 = arith.truncf %22 : vector<8x256xf32> to vector<8x256xbf16>
    %c0_14 = arith.constant 0 : index
    %c0_15 = arith.constant 0 : index
    %24 = vector.load %arg6[%c0_14, %c0_15] : memref<256x1xbf16, #tpu.memory_space<vmem>>, vector<256x1xbf16>
    %cst_16 = arith.constant dense<0.000000e+00> : vector<8x1xf32>
    %25 = tpu.matmul %23, %24, %cst_16 {dimension_numbers = #tpu.dot_dimension_numbers<[1], [0], [0], [1], [0, 0, 1, 1], [], []>} : vector<8x256xbf16>, vector<256x1xbf16>, vector<8x1xf32> -> vector<8x1xf32>
    %c0_17 = arith.constant 0 : index
    %c0_18 = arith.constant 0 : index
    %26 = memref.load %arg7[%c0_17, %c0_18] : memref<1x1xf32, #tpu.memory_space<smem>>
    %27 = vector.broadcast %26 : f32 to vector<8x1xf32>
    %28 = arith.addf %25, %27 : vector<8x1xf32>
    %29 = arith.negf %28 : vector<8x1xf32>
    %30 = math.exp %29 : vector<8x1xf32>
    %cst_19 = arith.constant 1.000000e+00 : f32
    %31 = vector.broadcast %cst_19 : f32 to vector<8x1xf32>
    %32 = arith.addf %31, %30 : vector<8x1xf32>
    %33 = arith.divf %31, %32 : vector<8x1xf32>
    %c0_20 = arith.constant 0 : index
    %c0_21 = arith.constant 0 : index
    %34 = vector.load %arg8[%c0_20, %c0_21] : memref<8x1xf32, #tpu.memory_space<vmem>>, vector<8x1xf32>
    tpu.vector_store %arg8[%c0_20, %c0_21], %33 {strides = array<i32>} : memref<8x1xf32, #tpu.memory_space<vmem>>, vector<8x1xf32>,
    return
  }
  func.func @transform_0(%arg0: i32) -> (i32, i32) {
    %c0_i32 = arith.constant 0 : i32
    %c0_i32_0 = arith.constant 0 : i32
    return %arg0, %c0_i32 : i32, i32
  }
  func.func @transform_1(%arg0: i32) -> (i32, i32) {
    %c0_i32 = arith.constant 0 : i32
    %c0_i32_0 = arith.constant 0 : i32
    %c0_i32_1 = arith.constant 0 : i32
    return %c0_i32, %c0_i32_0 : i32, i32
  }
  func.func @transform_2(%arg0: i32) -> (i32, i32) {
    %c0_i32 = arith.constant 0 : i32
    %c0_i32_0 = arith.constant 0 : i32
    %c0_i32_1 = arith.constant 0 : i32
    return %c0_i32, %c0_i32_0 : i32, i32
  }
  func.func @transform_3(%arg0: i32) -> (i32, i32) {
    %c0_i32 = arith.constant 0 : i32
    %c0_i32_0 = arith.constant 0 : i32
    %c0_i32_1 = arith.constant 0 : i32
    return %c0_i32, %c0_i32_0 : i32, i32
  }
  func.func @transform_4(%arg0: i32) -> (i32, i32) {
    %c0_i32 = arith.constant 0 : i32
    %c0_i32_0 = arith.constant 0 : i32
    %c0_i32_1 = arith.constant 0 : i32
    return %c0_i32, %c0_i32_0 : i32, i32
  }
  func.func @transform_5(%arg0: i32) -> (i32, i32) {
    %c0_i32 = arith.constant 0 : i32
    %c0_i32_0 = arith.constant 0 : i32
    %c0_i32_1 = arith.constant 0 : i32
    return %c0_i32, %c0_i32_0 : i32, i32
  }
  func.func @transform_6(%arg0: i32) -> (i32, i32) {
    %c0_i32 = arith.constant 0 : i32
    %c0_i32_0 = arith.constant 0 : i32
    %c0_i32_1 = arith.constant 0 : i32
    return %c0_i32, %c0_i32_0 : i32, i32
  }
  func.func @transform_7(%arg0: i32) -> (i32, i32) {
    %c0_i32 = arith.constant 0 : i32
    %c0_i32_0 = arith.constant 0 : i32
    return %arg0, %c0_i32 : i32, i32
  }
}

</mosaic_0001>

<llo_original>
// kernel: tpu_custom_call.1
$region0: #{tpu_custom_call.1}
  #allocation0 [shape = 'u32[]', space=smem, size = 0x4, offset = 0x4, fixed_abs, tag = 'smem constant byte address 0x4 - core index']
  #allocation1 [shape = 'u32[144,128]{1,0:T(1,128)}', space=vmem, size = 0x12000, scoped, tag = 'internal scratch']
  #allocation2 [shape = 'f32[1,1]{1,0:T(1,128)S(6)}', space=smem, size = 0x200, scoped, tag = 'scoped memory for tpu_custom_call.1']
  %s0 = inlined_call_operand.vmem [shape: f32[8,32], index: 0, kind: input, shape index: {}]
  %s1 = inlined_call_operand.vmem [shape: bf16[32,512], index: 1, kind: input, shape index: {}]
  %s2 = inlined_call_operand.vmem [shape: f32[1,512], index: 2, kind: input, shape index: {}]
  %s3 = inlined_call_operand.hbm [shape: bf16[512,256], index: 3, kind: input, shape index: {}]
  %s4 = inlined_call_operand.vmem [shape: f32[1,256], index: 4, kind: input, shape index: {}]
  %s5 = inlined_call_operand.vmem [shape: bf16[256,1], index: 5, kind: input, shape index: {}]
  %s6 = inlined_call_operand.<no memory space> [shape: f32[1,1], index: 6, kind: input, shape index: {}]
  %s7 = inlined_call_operand.vmem [shape: f32[8,1], index: 7, kind: output, shape index: {}]
  %s8 = sld [smem:[#allocation0]]
  $region42: #{tpu_custom_call.1} parent=0
    _
  %s10 = ssub.s32 1, %s8
  %s11 = scalar_select 0, %s10, %s8
  %12 = sst [smem:[#allocation2]] %s6
  $region1: #{tpu_custom_call.1} parent=0
    #allocation3 [shape = 'u8[262144]{0}', space=vmem, size = 0x40000, scoped, tag = 'input window, operand 3, single buffered']
    #allocation4 [shape = 's32[1]{0}', space=sflag, size = 0x4, scoped, tag = 'scoped memory for tpu_custom_call.1']
    %13 = vsyncpa [#allocation4], 0
    // Predicated region
    $region2: #{tpu_custom_call.1} parent=1 // pred_check
      _
    $region3: #{tpu_custom_call.1} parent=1 // pred_check_branch
      %15 = sbr.rel (0) target = $region5
    $region4: #{tpu_custom_call.1} parent=1 // pred_region
      _
    $region5: #{tpu_custom_call.1} parent=1 // pred_fallthru
      _
    // Predicated region
    $region6: #{tpu_custom_call.1} parent=1 // pred_check
      _
    $region7: #{tpu_custom_call.1} parent=1 // pred_check_branch
      %17 = sbr.rel (0) target = $region9
    $region8: #{tpu_custom_call.1} parent=1 // pred_region
      _
    $region9: #{tpu_custom_call.1} parent=1 // pred_fallthru
      _
    // Predicated region
    $region10: #{tpu_custom_call.1} parent=1 // pred_check
      _
    $region11: #{tpu_custom_call.1} parent=1 // pred_check_branch
      %19 = sbr.rel (0) target = $region13
    $region12: #{tpu_custom_call.1} parent=1 // pred_region
      _
    $region13: #{tpu_custom_call.1} parent=1 // pred_fallthru
      _
    // Predicated region
    $region14: #{tpu_custom_call.1} parent=1 // pred_check
      _
    $region15: #{tpu_custom_call.1} parent=1 // pred_check_branch
      %21 = sbr.rel (0) target = $region17
    $region16: #{tpu_custom_call.1} parent=1 // pred_region
      %s23 = ssub.s32 8192, 8192
      %24 = vsyncadd [#allocation4], %s23
      %s25 = sshll.u32 [#allocation3], 4
      %s26 = int_to_ptr.vmem [resolvable:$true] %s25
      %31 = dma.hbm_to_vmem [thread:$0]  %s3, 8192, %s26, [#allocation4], 128, 128, 8
    $region17: #{tpu_custom_call.1} parent=1 // pred_fallthru
      _
    // Predicated region
    $region18: #{tpu_custom_call.1} parent=1 // pred_check
      _
    $region19: #{tpu_custom_call.1} parent=1 // pred_check_branch
      %33 = sbr.rel (0) target = $region21
    $region20: #{tpu_custom_call.1} parent=1 // pred_region
      _
    $region21: #{tpu_custom_call.1} parent=1 // pred_fallthru
      _
    // Predicated region
    $region22: #{tpu_custom_call.1} parent=1 // pred_check
      _
    $region23: #{tpu_custom_call.1} parent=1 // pred_check_branch
      %35 = sbr.rel (0) target = $region25
    $region24: #{tpu_custom_call.1} parent=1 // pred_region
      _
    $region25: #{tpu_custom_call.1} parent=1 // pred_fallthru
      _
    // Predicated region
    $region26: #{tpu_custom_call.1} parent=1 // pred_check
      _
    $region27: #{tpu_custom_call.1} parent=1 // pred_check_branch
      %37 = sbr.rel (0) target = $region29
    $region28: #{tpu_custom_call.1} parent=1 // pred_region
      _
    $region29: #{tpu_custom_call.1} parent=1 // pred_fallthru
      _
    // Predicated region
    $region30: #{tpu_custom_call.1} parent=1 // pred_check
      _
    $region31: #{tpu_custom_call.1} parent=1 // pred_check_branch
      %39 = sbr.rel (0) target = $region33
    $region32: #{tpu_custom_call.1} parent=1 // pred_region
      %40 = dma.done [#allocation4], 8192
    $region33: #{tpu_custom_call.1} parent=1 // pred_fallthru
      _
    %v42 = vld [vmem:[%s0] sm:$0xff]
    %v43 = vpack.c.bf16 %v42, %v42
    %v44 = vld [vmem:[%s1] sm:$0xff]
    %v45 = vld [vmem:[%s1 + $0x8] sm:$0xff]
    %v46 = vld [vmem:[%s1 + $0x10] sm:$0xff]
    %v47 = vld [vmem:[%s1 + $0x18] sm:$0xff]
    %v48 = vld [vmem:[%s1 + $0x20] sm:$0xff]
    %v49 = vld [vmem:[%s1 + $0x28] sm:$0xff]
    %v50 = vld [vmem:[%s1 + $0x30] sm:$0xff]
    %v51 = vld [vmem:[%s1 + $0x38] sm:$0xff]
    %v52 = vld [vmem:[%s2] sm:$0xf]
    %v54 = vlaneseq
    %v55 = vshrl.u32 %v54, 7
    %v56 = vsub.s32 0, %v55
    %v57 = vrot.slane %v52, %v56
    %v58 = vlaneseq
    %v59 = vshrl.u32 %v58, 7
    %v60 = vsub.s32 1, %v59
    %v61 = vrot.slane %v52, %v60
    %v62 = vlaneseq
    %v63 = vshrl.u32 %v62, 7
    %v64 = vsub.s32 2, %v63
    %v65 = vrot.slane %v52, %v64
    %v66 = vlaneseq
    %v67 = vshrl.u32 %v66, 7
    %v68 = vsub.s32 3, %v67
    %v69 = vrot.slane %v52, %v68
    %v82 = vunpack.c.l.b16 %v44
    %v83 = vunpack.c.h.b16 %v44
    %v84 = vunpack.c.l.b16 %v45
    %v85 = vunpack.c.h.b16 %v45
    %v86 = vunpack.c.l.b16 %v46
    %v87 = vunpack.c.h.b16 %v46
    %v88 = vunpack.c.l.b16 %v47
    %v89 = vunpack.c.h.b16 %v47
    %v90 = vunpack.c.l.b16 %v48
    %v91 = vunpack.c.h.b16 %v48
    %v92 = vunpack.c.l.b16 %v49
    %v93 = vunpack.c.h.b16 %v49
    %v94 = vunpack.c.l.b16 %v50
    %v95 = vunpack.c.h.b16 %v50
    %v96 = vunpack.c.l.b16 %v51
    %v97 = vunpack.c.h.b16 %v51
    %v98 = vpack.c.b16 %v86, %v82
    %v99 = vpack.c.b16 %v87, %v83
    %v100 = vpack.c.b16 %v88, %v84
    %v101 = vpack.c.b16 %v89, %v85
    %v102 = vpack.c.b16 %v94, %v90
    %v103 = vpack.c.b16 %v95, %v91
    %v104 = vpack.c.b16 %v96, %v92
    %v105 = vpack.c.b16 %v97, %v93
    %vm114 = vcmask 261120
    %v116 = vsel %vm114, %v43, 0
    %118 = vmatprep.subr.bf16.mxu0 %v99
    %119 = vmatpush1.bf16.msra.mxu0 %v98
    %120 = vmatprep.subr.bf16.mxu0 %v103
    %121 = vmatpush1.bf16.msra.mxu0 %v102
    %122 = vmatprep.subr.bf16.mxu0 0
    %123 = vmatpush1.bf16.msra.mxu0 0
    %124 = vmatprep.subr.bf16.mxu0 0
    %125 = vmatpush1.bf16.msra.mxu0 0
    %126 = vmatprep.subr.bf16.mxu0 0
    %127 = vmatpush1.bf16.msra.mxu0 0
    %128 = vmatprep.subr.bf16.mxu0 0
    %129 = vmatpush1.bf16.msra.mxu0 0
    %130 = vmatprep.subr.bf16.mxu0 0
    %131 = vmatpush1.bf16.msra.mxu0 0
    %132 = vmatprep.subr.bf16.mxu0 0
    %133 = vmatpush1.bf16.msra.mxu0 0
    %134 = vmatprep.subr.bf16.mxu0 0
    %135 = vmatpush1.bf16.msra.mxu0 0
    %136 = vmatprep.subr.bf16.mxu0 0
    %137 = vmatpush1.bf16.msra.mxu0 0
    %138 = vmatprep.subr.bf16.mxu0 0
    %139 = vmatpush1.bf16.msra.mxu0 0
    %140 = vmatprep.subr.bf16.mxu0 0
    %141 = vmatpush1.bf16.msra.mxu0 0
    %142 = vmatprep.subr.bf16.mxu0 0
    %143 = vmatpush1.bf16.msra.mxu0 0
    %144 = vmatprep.subr.bf16.mxu0 0
    %145 = vmatpush1.bf16.msra.mxu0 0
    %146 = vmatprep.subr.bf16.mxu0 0
    %147 = vmatpush1.bf16.msra.mxu0 0
    %148 = vmatprep.subr.bf16.mxu0 0
    %149 = vmatpush1.bf16.msra.mxu0 0
    %150 = vmatprep.mubr.bf16.mxu0 0
    %151 = vmatmul.mubr.bf16.gmra.mrb[0].mxu0 %v116
    %v152 = vpop.f32.mrb[0].mxu0
    %v153 = vadd.f32 %v57, %v152
    %v154 = vpop.f32.mrb[0].mxu0
    %v155 = vadd.f32 %v61, %v154
    %v156 = vpop.f32.mrb[0].mxu0
    %v157 = vpop.f32.mrb[0].mxu0
    %158 = vdwg.mxu0
    %159 = vmatprep.subr.bf16.mxu0 %v101
    %160 = vmatpush1.bf16.msra.mxu0 %v100
    %161 = vmatprep.subr.bf16.mxu0 %v105
    %162 = vmatpush1.bf16.msra.mxu0 %v104
    %163 = vmatprep.subr.bf16.mxu0 0
    %164 = vmatpush1.bf16.msra.mxu0 0
    %165 = vmatprep.subr.bf16.mxu0 0
    %166 = vmatpush1.bf16.msra.mxu0 0
    %167 = vmatprep.subr.bf16.mxu0 0
    %168 = vmatpush1.bf16.msra.mxu0 0
    %169 = vmatprep.subr.bf16.mxu0 0
    %170 = vmatpush1.bf16.msra.mxu0 0
    %171 = vmatprep.subr.bf16.mxu0 0
    %172 = vmatpush1.bf16.msra.mxu0 0
    %173 = vmatprep.subr.bf16.mxu0 0
    %174 = vmatpush1.bf16.msra.mxu0 0
    %175 = vmatprep.subr.bf16.mxu0 0
    %176 = vmatpush1.bf16.msra.mxu0 0
    %177 = vmatprep.subr.bf16.mxu0 0
    %178 = vmatpush1.bf16.msra.mxu0 0
    %179 = vmatprep.subr.bf16.mxu0 0
    %180 = vmatpush1.bf16.msra.mxu0 0
    %181 = vmatprep.subr.bf16.mxu0 0
    %182 = vmatpush1.bf16.msra.mxu0 0
    %183 = vmatprep.subr.bf16.mxu0 0
    %184 = vmatpush1.bf16.msra.mxu0 0
    %185 = vmatprep.subr.bf16.mxu0 0
    %186 = vmatpush1.bf16.msra.mxu0 0
    %187 = vmatprep.subr.bf16.mxu0 0
    %188 = vmatpush1.bf16.msra.mxu0 0
    %189 = vmatprep.subr.bf16.mxu0 0
    %190 = vmatpush1.bf16.msra.mxu0 0
    %191 = vmatprep.mubr.bf16.mxu0 0
    %192 = vmatmul.mubr.bf16.gmra.mrb[0].mxu0 %v116
    %v193 = vpop.f32.mrb[0].mxu0
    %v194 = vadd.f32 %v65, %v193
    %v195 = vpop.f32.mrb[0].mxu0
    %v196 = vadd.f32 %v69, %v195
    %v197 = vpop.f32.mrb[0].mxu0
    %v198 = vpop.f32.mrb[0].mxu0
    %199 = vdwg.mxu0
    %vm200 = vcmp.gt.f32.partialorder %v153, 0.0
    %vm201 = vcmp.gt.f32.partialorder %v155, 0.0
    %vm202 = vcmp.gt.f32.partialorder %v194, 0.0
    %vm203 = vcmp.gt.f32.partialorder %v196, 0.0
    %v204 = vmul.f32 %v153, 0.2
    %v205 = vmul.f32 %v155, 0.2
    %v206 = vmul.f32 %v194, 0.2
    %v207 = vmul.f32 %v196, 0.2
    %v208 = vsel %vm200, %v153, %v204
    %v209 = vsel %vm201, %v155, %v205
    %v210 = vsel %vm202, %v194, %v206
    %v211 = vsel %vm203, %v196, %v207
    %v212 = vpack.c.bf16 %v208, %v208
    %v213 = vpack.c.bf16 %v209, %v209
    %v214 = vpack.c.bf16 %v210, %v210
    %v215 = vpack.c.bf16 %v211, %v211
    %v216 = vld [vmem:[#allocation3] sm:$0xff]
    %v217 = vld [vmem:[#allocation3 + $0x8] sm:$0xff]
    %v218 = vld [vmem:[#allocation3 + $0x10] sm:$0xff]
    %v219 = vld [vmem:[#allocation3 + $0x18] sm:$0xff]
    %v220 = vld [vmem:[#allocation3 + $0x20] sm:$0xff]
    %v221 = vld [vmem:[#allocation3 + $0x28] sm:$0xff]
    %v222 = vld [vmem:[#allocation3 + $0x30] sm:$0xff]
    %v223 = vld [vmem:[#allocation3 + $0x38] sm:$0xff]
    %v224 = vld [vmem:[#allocation3 + $0x40] sm:$0xff]
    %v225 = vld [vmem:[#allocation3 + $0x48] sm:$0xff]
    %v226 = vld [vmem:[#allocation3 + $0x50] sm:$0xff]
    %v227 = vld [vmem:[#allocation3 + $0x58] sm:$0xff]
    %v228 = vld [vmem:[#allocation3 + $0x60] sm:$0xff]
    %v229 = vld [vmem:[#allocation3 + $0x68] sm:$0xff]
    %v230 = vld [vmem:[#allocation3 + $0x70] sm:$0xff]
    %v231 = vld [vmem:[#allocation3 + $0x78] sm:$0xff]
    %v232 = vld [vmem:[#allocation3 + $0x80] sm:$0xff]
    %v233 = vld [vmem:[#allocation3 + $0x88] sm:$0xff]
    %v234 = vld [vmem:[#allocation3 + $0x90] sm:$0xff]
    %v235 = vld [vmem:[#allocation3 + $0x98] sm:$0xff]
    %v236 = vld [vmem:[#allocation3 + $0xa0] sm:$0xff]
    %v237 = vld [vmem:[#allocation3 + $0xa8] sm:$0xff]
    %v238 = vld [vmem:[#allocation3 + $0xb0] sm:$0xff]
    %v239 = vld [vmem:[#allocation3 + $0xb8] sm:$0xff]
    %v240 = vld [vmem:[#allocation3 + $0xc0] sm:$0xff]
    %v241 = vld [vmem:[#allocation3 + $0xc8] sm:$0xff]
    %v242 = vld [vmem:[#allocation3 + $0xd0] sm:$0xff]
    %v243 = vld [vmem:[#allocation3 + $0xd8] sm:$0xff]
    %v244 = vld [vmem:[#allocation3 + $0xe0] sm:$0xff]
    %v245 = vld [vmem:[#allocation3 + $0xe8] sm:$0xff]
    %v246 = vld [vmem:[#allocation3 + $0xf0] sm:$0xff]
    %v247 = vld [vmem:[#allocation3 + $0xf8] sm:$0xff]
    %v248 = vld [vmem:[#allocation3 + $0x100] sm:$0xff]
    %v249 = vld [vmem:[#allocation3 + $0x108] sm:$0xff]
    %v250 = vld [vmem:[#allocation3 + $0x110] sm:$0xff]
    %v251 = vld [vmem:[#allocation3 + $0x118] sm:$0xff]
    %v252 = vld [vmem:[#allocation3 + $0x120] sm:$0xff]
    %v253 = vld [vmem:[#allocation3 + $0x128] sm:$0xff]
    %v254 = vld [vmem:[#allocation3 + $0x130] sm:$0xff]
    %v255 = vld [vmem:[#allocation3 + $0x138] sm:$0xff]
    %v256 = vld [vmem:[#allocation3 + $0x140] sm:$0xff]
    %v257 = vld [vmem:[#allocation3 + $0x148] sm:$0xff]
    %v258 = vld [vmem:[#allocation3 + $0x150] sm:$0xff]
    %v259 = vld [vmem:[#allocation3 + $0x158] sm:$0xff]
    %v260 = vld [vmem:[#allocation3 + $0x160] sm:$0xff]
    %v261 = vld [vmem:[#allocation3 + $0x168] sm:$0xff]
    %v262 = vld [vmem:[#allocation3 + $0x170] sm:$0xff]
    %v263 = vld [vmem:[#allocation3 + $0x178] sm:$0xff]
    %v264 = vld [vmem:[#allocation3 + $0x180] sm:$0xff]
    %v265 = vld [vmem:[#allocation3 + $0x188] sm:$0xff]
    %v266 = vld [vmem:[#allocation3 + $0x190] sm:$0xff]
    %v267 = vld [vmem:[#allocation3 + $0x198] sm:$0xff]
    %v268 = vld [vmem:[#allocation3 + $0x1a0] sm:$0xff]
    %v269 = vld [vmem:[#allocation3 + $0x1a8] sm:$0xff]
    %v270 = vld [vmem:[#allocation3 + $0x1b0] sm:$0xff]
    %v271 = vld [vmem:[#allocation3 + $0x1b8] sm:$0xff]
    %v272 = vld [vmem:[#allocation3 + $0x1c0] sm:$0xff]
    %v273 = vld [vmem:[#allocation3 + $0x1c8] sm:$0xff]
    %v274 = vld [vmem:[#allocation3 + $0x1d0] sm:$0xff]
    %v275 = vld [vmem:[#allocation3 + $0x1d8] sm:$0xff]
    %v276 = vld [vmem:[#allocation3 + $0x1e0] sm:$0xff]
    %v277 = vld [vmem:[#allocation3 + $0x1e8] sm:$0xff]
    %v278 = vld [vmem:[#allocation3 + $0x1f0] sm:$0xff]
    %v279 = vld [vmem:[#allocation3 + $0x1f8] sm:$0xff]
    %v280 = vld [vmem:[%s4] sm:$0x3]
    %v282 = vlaneseq
    %v283 = vshrl.u32 %v282, 7
    %v284 = vsub.s32 0, %v283
    %v285 = vrot.slane %v280, %v284
    %v286 = vlaneseq
    %v287 = vshrl.u32 %v286, 7
    %v288 = vsub.s32 1, %v287
    %v289 = vrot.slane %v280, %v288
    %v356 = vunpack.c.l.b16 %v216
    %v357 = vunpack.c.h.b16 %v216
    %v358 = vunpack.c.l.b16 %v217
    %v359 = vunpack.c.h.b16 %v217
    %v360 = vunpack.c.l.b16 %v218
    %v361 = vunpack.c.h.b16 %v218
    %v362 = vunpack.c.l.b16 %v219
    %v363 = vunpack.c.h.b16 %v219
    %v364 = vunpack.c.l.b16 %v220
    %v365 = vunpack.c.h.b16 %v220
    %v366 = vunpack.c.l.b16 %v221
    %v367 = vunpack.c.h.b16 %v221
    %v368 = vunpack.c.l.b16 %v222
    %v369 = vunpack.c.h.b16 %v222
    %v370 = vunpack.c.l.b16 %v223
    %v371 = vunpack.c.h.b16 %v223
    %v372 = vunpack.c.l.b16 %v224
    %v373 = vunpack.c.h.b16 %v224
    %v374 = vunpack.c.l.b16 %v225
    %v375 = vunpack.c.h.b16 %v225
    %v376 = vunpack.c.l.b16 %v226
    %v377 = vunpack.c.h.b16 %v226
    %v378 = vunpack.c.l.b16 %v227
    %v379 = vunpack.c.h.b16 %v227
    %v380 = vunpack.c.l.b16 %v228
    %v381 = vunpack.c.h.b16 %v228
    %v382 = vunpack.c.l.b16 %v229
    %v383 = vunpack.c.h.b16 %v229
    %v384 = vunpack.c.l.b16 %v230
    %v385 = vunpack.c.h.b16 %v230
    %v386 = vunpack.c.l.b16 %v231
    %v387 = vunpack.c.h.b16 %v231
    %v388 = vunpack.c.l.b16 %v232
    %v389 = vunpack.c.h.b16 %v232
    %v390 = vunpack.c.l.b16 %v233
    %v391 = vunpack.c.h.b16 %v233
    %v392 = vunpack.c.l.b16 %v234
    %v393 = vunpack.c.h.b16 %v234
    %v394 = vunpack.c.l.b16 %v235
    %v395 = vunpack.c.h.b16 %v235
    %v396 = vunpack.c.l.b16 %v236
    %v397 = vunpack.c.h.b16 %v236
    %v398 = vunpack.c.l.b16 %v237
    %v399 = vunpack.c.h.b16 %v237
    %v400 = vunpack.c.l.b16 %v238
    %v401 = vunpack.c.h.b16 %v238
    %v402 = vunpack.c.l.b16 %v239
    %v403 = vunpack.c.h.b16 %v239
    %v404 = vunpack.c.l.b16 %v240
    %v405 = vunpack.c.h.b16 %v240
    %v406 = vunpack.c.l.b16 %v241
    %v407 = vunpack.c.h.b16 %v241
    %v408 = vunpack.c.l.b16 %v242
    %v409 = vunpack.c.h.b16 %v242
    %v410 = vunpack.c.l.b16 %v243
    %v411 = vunpack.c.h.b16 %v243
    %v412 = vunpack.c.l.b16 %v244
    %v413 = vunpack.c.h.b16 %v244
    %v414 = vunpack.c.l.b16 %v245
    %v415 = vunpack.c.h.b16 %v245
    %v416 = vunpack.c.l.b16 %v246
    %v417 = vunpack.c.h.b16 %v246
    %v418 = vunpack.c.l.b16 %v247
    %v419 = vunpack.c.h.b16 %v247
    %v420 = vunpack.c.l.b16 %v248
    %v421 = vunpack.c.h.b16 %v248
    %v422 = vunpack.c.l.b16 %v249
    %v423 = vunpack.c.h.b16 %v249
    %v424 = vunpack.c.l.b16 %v250
    %v425 = vunpack.c.h.b16 %v250
    %v426 = vunpack.c.l.b16 %v251
    %v427 = vunpack.c.h.b16 %v251
    %v428 = vunpack.c.l.b16 %v252
    %v429 = vunpack.c.h.b16 %v252
    %v430 = vunpack.c.l.b16 %v253
    %v431 = vunpack.c.h.b16 %v253
    %v432 = vunpack.c.l.b16 %v254
    %v433 = vunpack.c.h.b16 %v254
    %v434 = vunpack.c.l.b16 %v255
    %v435 = vunpack.c.h.b16 %v255
    %v436 = vunpack.c.l.b16 %v256
    %v437 = vunpack.c.h.b16 %v256
    %v438 = vunpack.c.l.b16 %v257
    %v439 = vunpack.c.h.b16 %v257
    %v440 = vunpack.c.l.b16 %v258
    %v441 = vunpack.c.h.b16 %v258
    %v442 = vunpack.c.l.b16 %v259
    %v443 = vunpack.c.h.b16 %v259
    %v444 = vunpack.c.l.b16 %v260
    %v445 = vunpack.c.h.b16 %v260
    %v446 = vunpack.c.l.b16 %v261
    %v447 = vunpack.c.h.b16 %v261
    %v448 = vunpack.c.l.b16 %v262
    %v449 = vunpack.c.h.b16 %v262
    %v450 = vunpack.c.l.b16 %v263
    %v451 = vunpack.c.h.b16 %v263
    %v452 = vunpack.c.l.b16 %v264
    %v453 = vunpack.c.h.b16 %v264
    %v454 = vunpack.c.l.b16 %v265
    %v455 = vunpack.c.h.b16 %v265
    %v456 = vunpack.c.l.b16 %v266
    %v457 = vunpack.c.h.b16 %v266
    %v458 = vunpack.c.l.b16 %v267
    %v459 = vunpack.c.h.b16 %v267
    %v460 = vunpack.c.l.b16 %v268
    %v461 = vunpack.c.h.b16 %v268
    %v462 = vunpack.c.l.b16 %v269
    %v463 = vunpack.c.h.b16 %v269
    %v464 = vunpack.c.l.b16 %v270
    %v465 = vunpack.c.h.b16 %v270
    %v466 = vunpack.c.l.b16 %v271
    %v467 = vunpack.c.h.b16 %v271
    %v468 = vunpack.c.l.b16 %v272
    %v469 = vunpack.c.h.b16 %v272
    %v470 = vunpack.c.l.b16 %v273
    %v471 = vunpack.c.h.b16 %v273
    %v472 = vunpack.c.l.b16 %v274
    %v473 = vunpack.c.h.b16 %v274
    %v474 = vunpack.c.l.b16 %v275
    %v475 = vunpack.c.h.b16 %v275
    %v476 = vunpack.c.l.b16 %v276
    %v477 = vunpack.c.h.b16 %v276
    %v478 = vunpack.c.l.b16 %v277
    %v479 = vunpack.c.h.b16 %v277
    %v480 = vunpack.c.l.b16 %v278
    %v481 = vunpack.c.h.b16 %v278
    %v482 = vunpack.c.l.b16 %v279
    %v483 = vunpack.c.h.b16 %v279
    %v484 = vpack.c.b16 %v358, %v356
    %v485 = vpack.c.b16 %v359, %v357
    %v486 = vpack.c.b16 %v362, %v360
    %v487 = vpack.c.b16 %v363, %v361
    %v488 = vpack.c.b16 %v366, %v364
    %v489 = vpack.c.b16 %v367, %v365
    %v490 = vpack.c.b16 %v370, %v368
    %v491 = vpack.c.b16 %v371, %v369
    %v492 = vpack.c.b16 %v374, %v372
    %v493 = vpack.c.b16 %v375, %v373
    %v494 = vpack.c.b16 %v378, %v376
    %v495 = vpack.c.b16 %v379, %v377
    %v496 = vpack.c.b16 %v382, %v380
    %v497 = vpack.c.b16 %v383, %v381
    %v498 = vpack.c.b16 %v386, %v384
    %v499 = vpack.c.b16 %v387, %v385
    %v500 = vpack.c.b16 %v390, %v388
    %v501 = vpack.c.b16 %v391, %v389
    %v502 = vpack.c.b16 %v394, %v392
    %v503 = vpack.c.b16 %v395, %v393
    %v504 = vpack.c.b16 %v398, %v396
    %v505 = vpack.c.b16 %v399, %v397
    %v506 = vpack.c.b16 %v402, %v400
    %v507 = vpack.c.b16 %v403, %v401
    %v508 = vpack.c.b16 %v406, %v404
    %v509 = vpack.c.b16 %v407, %v405
    %v510 = vpack.c.b16 %v410, %v408
    %v511 = vpack.c.b16 %v411, %v409
    %v512 = vpack.c.b16 %v414, %v412
    %v513 = vpack.c.b16 %v415, %v413
    %v514 = vpack.c.b16 %v418, %v416
    %v515 = vpack.c.b16 %v419, %v417
    %v516 = vpack.c.b16 %v422, %v420
    %v517 = vpack.c.b16 %v423, %v421
    %v518 = vpack.c.b16 %v426, %v424
    %v519 = vpack.c.b16 %v427, %v425
    %v520 = vpack.c.b16 %v430, %v428
    %v521 = vpack.c.b16 %v431, %v429
    %v522 = vpack.c.b16 %v434, %v432
    %v523 = vpack.c.b16 %v435, %v433
    %v524 = vpack.c.b16 %v438, %v436
    %v525 = vpack.c.b16 %v439, %v437
    %v526 = vpack.c.b16 %v442, %v440
    %v527 = vpack.c.b16 %v443, %v441
    %v528 = vpack.c.b16 %v446, %v444
    %v529 = vpack.c.b16 %v447, %v445
    %v530 = vpack.c.b16 %v450, %v448
    %v531 = vpack.c.b16 %v451, %v449
    %v532 = vpack.c.b16 %v454, %v452
    %v533 = vpack.c.b16 %v455, %v453
    %v534 = vpack.c.b16 %v458, %v456
    %v535 = vpack.c.b16 %v459, %v457
    %v536 = vpack.c.b16 %v462, %v460
    %v537 = vpack.c.b16 %v463, %v461
    %v538 = vpack.c.b16 %v466, %v464
    %v539 = vpack.c.b16 %v467, %v465
    %v540 = vpack.c.b16 %v470, %v468
    %v541 = vpack.c.b16 %v471, %v469
    %v542 = vpack.c.b16 %v474, %v472
    %v543 = vpack.c.b16 %v475, %v473
    %v544 = vpack.c.b16 %v478, %v476
    %v545 = vpack.c.b16 %v479, %v477
    %v546 = vpack.c.b16 %v482, %v480
    %v547 = vpack.c.b16 %v483, %v481
    %612 = vmatprep.subr.bf16.mxu0 %v485
    %613 = vmatpush1.bf16.msra.mxu0 %v484
    %614 = vmatprep.subr.bf16.mxu0 %v487
    %615 = vmatpush1.bf16.msra.mxu0 %v486
    %616 = vmatprep.subr.bf16.mxu0 %v489
    %617 = vmatpush1.bf16.msra.mxu0 %v488
    %618 = vmatprep.subr.bf16.mxu0 %v491
    %619 = vmatpush1.bf16.msra.mxu0 %v490
    %620 = vmatprep.subr.bf16.mxu0 %v493
    %621 = vmatpush1.bf16.msra.mxu0 %v492
    %622 = vmatprep.subr.bf16.mxu0 %v495
    %623 = vmatpush1.bf16.msra.mxu0 %v494
    %624 = vmatprep.subr.bf16.mxu0 %v497
    %625 = vmatpush1.bf16.msra.mxu0 %v496
    %626 = vmatprep.subr.bf16.mxu0 %v499
    %627 = vmatpush1.bf16.msra.mxu0 %v498
    %628 = vmatprep.subr.bf16.mxu0 %v501
    %629 = vmatpush1.bf16.msra.mxu0 %v500
    %630 = vmatprep.subr.bf16.mxu0 %v503
    %631 = vmatpush1.bf16.msra.mxu0 %v502
    %632 = vmatprep.subr.bf16.mxu0 %v505
    %633 = vmatpush1.bf16.msra.mxu0 %v504
    %634 = vmatprep.subr.bf16.mxu0 %v507
    %635 = vmatpush1.bf16.msra.mxu0 %v506
    %636 = vmatprep.subr.bf16.mxu0 %v509
    %637 = vmatpush1.bf16.msra.mxu0 %v508
    %638 = vmatprep.subr.bf16.mxu0 %v511
    %639 = vmatpush1.bf16.msra.mxu0 %v510
    %640 = vmatprep.subr.bf16.mxu0 %v513
    %641 = vmatpush1.bf16.msra.mxu0 %v512
    %642 = vmatprep.subr.bf16.mxu0 %v515
    %643 = vmatpush1.bf16.msra.mxu0 %v514
    %644 = vmatprep.mubr.bf16.mxu0 %v213
    %645 = vmatmul.mubr.bf16.gmra.mrb[0].mxu0 %v212
    %v646 = vpop.f32.mrb[0].mxu0
    %v647 = vadd.f32 %v285, %v646
    %v648 = vpop.f32.mrb[0].mxu0
    %v649 = vadd.f32 %v289, %v648
    %v650 = vpop.f32.mrb[0].mxu0
    %v651 = vpop.f32.mrb[0].mxu0
    %652 = vdwg.mxu0
    %653 = vmatprep.subr.bf16.mxu0 %v517
    %654 = vmatpush1.bf16.msra.mxu0 %v516
    %655 = vmatprep.subr.bf16.mxu0 %v519
    %656 = vmatpush1.bf16.msra.mxu0 %v518
    %657 = vmatprep.subr.bf16.mxu0 %v521
    %658 = vmatpush1.bf16.msra.mxu0 %v520
    %659 = vmatprep.subr.bf16.mxu0 %v523
    %660 = vmatpush1.bf16.msra.mxu0 %v522
    %661 = vmatprep.subr.bf16.mxu0 %v525
    %662 = vmatpush1.bf16.msra.mxu0 %v524
    %663 = vmatprep.subr.bf16.mxu0 %v527
    %664 = vmatpush1.bf16.msra.mxu0 %v526
    %665 = vmatprep.subr.bf16.mxu0 %v529
    %666 = vmatpush1.bf16.msra.mxu0 %v528
    %667 = vmatprep.subr.bf16.mxu0 %v531
    %668 = vmatpush1.bf16.msra.mxu0 %v530
    %669 = vmatprep.subr.bf16.mxu0 %v533
    %670 = vmatpush1.bf16.msra.mxu0 %v532
    %671 = vmatprep.subr.bf16.mxu0 %v535
    %672 = vmatpush1.bf16.msra.mxu0 %v534
    %673 = vmatprep.subr.bf16.mxu0 %v537
    %674 = vmatpush1.bf16.msra.mxu0 %v536
    %675 = vmatprep.subr.bf16.mxu0 %v539
    %676 = vmatpush1.bf16.msra.mxu0 %v538
    %677 = vmatprep.subr.bf16.mxu0 %v541
    %678 = vmatpush1.bf16.msra.mxu0 %v540
    %679 = vmatprep.subr.bf16.mxu0 %v543
    %680 = vmatpush1.bf16.msra.mxu0 %v542
    %681 = vmatprep.subr.bf16.mxu0 %v545
    %682 = vmatpush1.bf16.msra.mxu0 %v544
    %683 = vmatprep.subr.bf16.mxu0 %v547
    %684 = vmatpush1.bf16.msra.mxu0 %v546
    %685 = vmatprep.mubr.bf16.mxu0 %v215
    %686 = vmatmul.mubr.bf16.gmra.mrb[0].mxu0 %v214
    %v687 = vpop.f32.mrb[0].mxu0
    %v688 = vadd.f32 %v647, %v687
    %v689 = vpop.f32.mrb[0].mxu0
    %v690 = vadd.f32 %v649, %v689
    %v691 = vpop.f32.mrb[0].mxu0
    %v692 = vpop.f32.mrb[0].mxu0
    %693 = vdwg.mxu0
    %vm694 = vcmp.gt.f32.partialorder %v688, 0.0
    %vm695 = vcmp.gt.f32.partialorder %v690, 0.0
    %v696 = vmul.f32 %v688, 0.2
    %v697 = vmul.f32 %v690, 0.2
    %v698 = vsel %vm694, %v688, %v696
    %v699 = vsel %vm695, %v690, %v697
    %v700 = vpack.c.bf16 %v698, %v698
    %v701 = vpack.c.bf16 %v699, %v699
    %v702 = vld [vmem:[%s5] sm:$0xf]
    %v703 = vld [vmem:[%s5 + $0x4] sm:$0xf]
    %v704 = vld [vmem:[%s5 + $0x8] sm:$0xf]
    %v705 = vld [vmem:[%s5 + $0xc] sm:$0xf]
    %v706 = vld [vmem:[%s5 + $0x10] sm:$0xf]
    %v707 = vld [vmem:[%s5 + $0x14] sm:$0xf]
    %v708 = vld [vmem:[%s5 + $0x18] sm:$0xf]
    %v709 = vld [vmem:[%s5 + $0x1c] sm:$0xf]
    %v710 = vld [vmem:[%s5 + $0x20] sm:$0xf]
    %v711 = vld [vmem:[%s5 + $0x24] sm:$0xf]
    %v712 = vld [vmem:[%s5 + $0x28] sm:$0xf]
    %v713 = vld [vmem:[%s5 + $0x2c] sm:$0xf]
    %v714 = vld [vmem:[%s5 + $0x30] sm:$0xf]
    %v715 = vld [vmem:[%s5 + $0x34] sm:$0xf]
    %v716 = vld [vmem:[%s5 + $0x38] sm:$0xf]
    %v717 = vld [vmem:[%s5 + $0x3c] sm:$0xf]
    %v718 = vld [vmem:[%s5 + $0x40] sm:$0xf]
    %v719 = vld [vmem:[%s5 + $0x44] sm:$0xf]
    %v720 = vld [vmem:[%s5 + $0x48] sm:$0xf]
    %v721 = vld [vmem:[%s5 + $0x4c] sm:$0xf]
    %v722 = vld [vmem:[%s5 + $0x50] sm:$0xf]
    %v723 = vld [vmem:[%s5 + $0x54] sm:$0xf]
    %v724 = vld [vmem:[%s5 + $0x58] sm:$0xf]
    %v725 = vld [vmem:[%s5 + $0x5c] sm:$0xf]
    %v726 = vld [vmem:[%s5 + $0x60] sm:$0xf]
    %v727 = vld [vmem:[%s5 + $0x64] sm:$0xf]
    %v728 = vld [vmem:[%s5 + $0x68] sm:$0xf]
    %v729 = vld [vmem:[%s5 + $0x6c] sm:$0xf]
    %v730 = vld [vmem:[%s5 + $0x70] sm:$0xf]
    %v731 = vld [vmem:[%s5 + $0x74] sm:$0xf]
    %v732 = vld [vmem:[%s5 + $0x78] sm:$0xf]
    %v733 = vld [vmem:[%s5 + $0x7c] sm:$0xf]
    %s734 = sld [smem:[#allocation2]]
    %v735 = vstv %s734
    %v768 = vunpack.c.l.b16 %v702
    %v769 = vunpack.c.l.b16 %v703
    %v770 = vunpack.c.l.b16 %v704
    %v771 = vunpack.c.l.b16 %v705
    %v772 = vunpack.c.l.b16 %v706
    %v773 = vunpack.c.l.b16 %v707
    %v774 = vunpack.c.l.b16 %v708
    %v775 = vunpack.c.l.b16 %v709
    %v776 = vunpack.c.l.b16 %v710
    %v777 = vunpack.c.l.b16 %v711
    %v778 = vunpack.c.l.b16 %v712
    %v779 = vunpack.c.l.b16 %v713
    %v780 = vunpack.c.l.b16 %v714
    %v781 = vunpack.c.l.b16 %v715
    %v782 = vunpack.c.l.b16 %v716
    %v783 = vunpack.c.l.b16 %v717
    %v784 = vunpack.c.l.b16 %v718
    %v785 = vunpack.c.l.b16 %v719
    %v786 = vunpack.c.l.b16 %v720
    %v787 = vunpack.c.l.b16 %v721
    %v788 = vunpack.c.l.b16 %v722
    %v789 = vunpack.c.l.b16 %v723
    %v790 = vunpack.c.l.b16 %v724
    %v791 = vunpack.c.l.b16 %v725
    %v792 = vunpack.c.l.b16 %v726
    %v793 = vunpack.c.l.b16 %v727
    %v794 = vunpack.c.l.b16 %v728
    %v795 = vunpack.c.l.b16 %v729
    %v796 = vunpack.c.l.b16 %v730
    %v797 = vunpack.c.l.b16 %v731
    %v798 = vunpack.c.l.b16 %v732
    %v799 = vunpack.c.l.b16 %v733
    %v800 = vpack.c.b16 %v769, %v768
    %v801 = vpack.c.b16 %v771, %v770
    %v802 = vpack.c.b16 %v773, %v772
    %v803 = vpack.c.b16 %v775, %v774
    %v804 = vpack.c.b16 %v777, %v776
    %v805 = vpack.c.b16 %v779, %v778
    %v806 = vpack.c.b16 %v781, %v780
    %v807 = vpack.c.b16 %v783, %v782
    %v808 = vpack.c.b16 %v785, %v784
    %v809 = vpack.c.b16 %v787, %v786
    %v810 = vpack.c.b16 %v789, %v788
    %v811 = vpack.c.b16 %v791, %v790
    %v812 = vpack.c.b16 %v793, %v792
    %v813 = vpack.c.b16 %v795, %v794
    %v814 = vpack.c.b16 %v797, %v796
    %v815 = vpack.c.b16 %v799, %v798
    %832 = vmatprep.subr.bf16.mxu0 0
    %833 = vmatpush1.bf16.msra.mxu0 %v800
    %834 = vmatprep.subr.bf16.mxu0 0
    %835 = vmatpush1.bf16.msra.mxu0 %v801
    %836 = vmatprep.subr.bf16.mxu0 0
    %837 = vmatpush1.bf16.msra.mxu0 %v802
    %838 = vmatprep.subr.bf16.mxu0 0
    %839 = vmatpush1.bf16.msra.mxu0 %v803
    %840 = vmatprep.subr.bf16.mxu0 0
    %841 = vmatpush1.bf16.msra.mxu0 %v804
    %842 = vmatprep.subr.bf16.mxu0 0
    %843 = vmatpush1.bf16.msra.mxu0 %v805
    %844 = vmatprep.subr.bf16.mxu0 0
    %845 = vmatpush1.bf16.msra.mxu0 %v806
    %846 = vmatprep.subr.bf16.mxu0 0
    %847 = vmatpush1.bf16.msra.mxu0 %v807
    %848 = vmatprep.subr.bf16.mxu0 0
    %849 = vmatpush1.bf16.msra.mxu0 %v808
    %850 = vmatprep.subr.bf16.mxu0 0
    %851 = vmatpush1.bf16.msra.mxu0 %v809
    %852 = vmatprep.subr.bf16.mxu0 0
    %853 = vmatpush1.bf16.msra.mxu0 %v810
    %854 = vmatprep.subr.bf16.mxu0 0
    %855 = vmatpush1.bf16.msra.mxu0 %v811
    %856 = vmatprep.subr.bf16.mxu0 0
    %857 = vmatpush1.bf16.msra.mxu0 %v812
    %858 = vmatprep.subr.bf16.mxu0 0
    %859 = vmatpush1.bf16.msra.mxu0 %v813
    %860 = vmatprep.subr.bf16.mxu0 0
    %861 = vmatpush1.bf16.msra.mxu0 %v814
    %862 = vmatprep.subr.bf16.mxu0 0
    %863 = vmatpush1.bf16.msra.mxu0 %v815
    %864 = vmatprep.mubr.bf16.mxu0 %v701
    %865 = vmatmul.mubr.bf16.gmra.mrb[0].mxu0 %v700
    %v866 = vpop.f32.mrb[0].mxu0
    %v867 = vadd.f32 %v735, %v866
    %v868 = vpop.f32.mrb[0].mxu0
    %v869 = vpop.f32.mrb[0].mxu0
    %v870 = vpop.f32.mrb[0].mxu0
    %871 = vdwg.mxu0
    %v872 = vxor.u32 %v867, 2147483648
    %v873 = vmul.f32 %v872, 1.442695
    %v874 = vpow.pop %v873
    %v875 = vadd.f32 %v874, 1.0
    %v876 = vrcp.pop %v875
    %v877 = vmul.f32 1.0, %v876
    %vm878 = vcmask 7168
    %879 = vst.msk [vmem:[%s7] sm:$0xff] %vm878, %v877
    // Predicated region
    $region34: #{tpu_custom_call.1} parent=1 // pred_check
      _
    $region35: #{tpu_custom_call.1} parent=1 // pred_check_branch
      %881 = sbr.rel (0) target = $region37
    $region36: #{tpu_custom_call.1} parent=1 // pred_region
      _
    $region37: #{tpu_custom_call.1} parent=1 // pred_fallthru
      _
    // Predicated region
    $region38: #{tpu_custom_call.1} parent=1 // pred_check
      _
    $region39: #{tpu_custom_call.1} parent=1 // pred_check_branch
      %883 = sbr.rel (0) target = $region41
    $region40: #{tpu_custom_call.1} parent=1 // pred_region
      _
    $region41: #{tpu_custom_call.1} parent=1 // pred_fallthru
      _
    %884 = vsyncpa [#allocation4], 1

</llo_original>
